<compile_context>
chip_gen: v5e
topology: v5e:2x2
jax: 0.10.0
libtpu: 0.0.40
codegen_flags: <defaults>
</compile_context>

<pallas_src>
import jax
import jax.numpy as jnp
from jax.experimental import pallas as pl
from jax.experimental.pallas import tpu as pltpu

D_IN = 784                 # no K padding (784 is sublane-aligned; equals full array dim for x)
D1, D2 = 256, 128
D3, D3_PAD = 64, 128       # pad the 64-wide hidden dim to a full 128-lane slab
D_OUT, D_OUT_PAD = 10, 128 # lane-dense output slab (unmasked vst); wrapper slices [:, :10]


def _round_up(x, m):
    return (x + m - 1) // m * m


def _cdiv(a, b):
    return -(-a // b)


def mlp_kernel(x_ref, w1_ref, w2_ref, w3_ref, w4_ref, o_ref):
    # Whole hot path fused: in-kernel f32->bf16 cast, 4 MXU matmuls with f32 accumulation,
    # ReLUs on the VPU (free filler in this mem-bound regime).
    x = x_ref[...].astype(jnp.bfloat16)
    h = jnp.dot(x, w1_ref[...], preferred_element_type=jnp.float32)
    h = jnp.maximum(h, 0.0).astype(jnp.bfloat16)
    h = jnp.dot(h, w2_ref[...], preferred_element_type=jnp.float32)
    h = jnp.maximum(h, 0.0).astype(jnp.bfloat16)
    h = jnp.dot(h, w3_ref[...], preferred_element_type=jnp.float32)
    h = jnp.maximum(h, 0.0).astype(jnp.bfloat16)
    o_ref[...] = jnp.dot(h, w4_ref[...], preferred_element_type=jnp.float32).astype(o_ref.dtype)


def prepare_params(w1, w2, w3, w4):
    """One-time conversion of PyTorch-layout [out, in] f32 weights to kernel layout (bf16).

    Keep the result around and reuse across forward calls (no per-call transposes/casts).
    Zero padding of the 64-wide dim cancels exactly (ReLU(0)=0 and zero weight rows).
    """
    w1t = w1.T.astype(jnp.bfloat16)                                            # (784, 256)
    w2t = w2.T.astype(jnp.bfloat16)                                            # (256, 128)
    w3t = jnp.zeros((D2, D3_PAD), jnp.bfloat16).at[:, :D3].set(
        w3.T.astype(jnp.bfloat16))                                             # (128, 128)
    w4t = jnp.zeros((D3_PAD, D_OUT_PAD), jnp.bfloat16).at[:D3, :D_OUT].set(
        w4.T.astype(jnp.bfloat16))                                             # (128, 128)
    return w1t, w2t, w3t, w4t


def neural_net_forward(x, params, *, batch_tile=256, vmem_limit_bytes=48 * 1024 * 1024):
    """x: [B, 784] f32. params: output of prepare_params. Returns [B, 10] f32."""
    w1t, w2t, w3t, w4t = params
    B, d_in = x.shape
    assert d_in == D_IN

    # Tile the batch: clamp for tiny batches, then shrink the tile so padded rows are minimal
    # (keeps the same number of grid steps but avoids e.g. B=520 -> 1024 worth of wasted DMA).
    bt = min(batch_tile, _round_up(B, 8))
    n_tiles = _cdiv(B, bt)
    bt = _round_up(_cdiv(B, n_tiles), 8)
    b_pad = bt * n_tiles

    if b_pad != B:
        x = jnp.pad(x, ((0, b_pad - B), (0, 0)))  # rows only; f32->bf16 cast happens in-kernel

    out = pl.pallas_call(
        mlp_kernel,
        out_shape=jax.ShapeDtypeStruct((b_pad, D_OUT_PAD), jnp.bfloat16),
        grid_spec=pltpu.PrefetchScalarGridSpec(
            num_scalar_prefetch=0,
            grid=(n_tiles,),
            in_specs=[
                # x block: last dim 784 equals the full array dim -> valid BlockSpec.
                pl.BlockSpec((bt, D_IN), lambda i: (i, 0)),
                # Weight blocks: constant index maps -> fetched once, resident across grid steps.
                pl.BlockSpec((D_IN, D1), lambda i: (0, 0)),
                pl.BlockSpec((D1, D2), lambda i: (0, 0)),
                pl.BlockSpec((D2, D3_PAD), lambda i: (0, 0)),
                pl.BlockSpec((D3_PAD, D_OUT_PAD), lambda i: (0, 0)),
            ],
            out_specs=pl.BlockSpec((bt, D_OUT_PAD), lambda i: (i, 0)),
        ),
        compiler_params=pltpu.CompilerParams(
            dimension_semantics=("parallel",),
            vmem_limit_bytes=vmem_limit_bytes,
        ),
    )(x, w1t, w2t, w3t, w4t)

    # Slice the useful 10 logits and restore f32 (PyTorch output dtype); XLA fuses this copy.
    return out[:B, :D_OUT].astype(jnp.float32)


if __name__ == "__main__":
    key = jax.random.PRNGKey(0)
    kx, k1, k2, k3, k4 = jax.random.split(key, 5)

    B = 8  # small demo batch; padding/tiling logic handles arbitrary B
    x = jax.random.normal(kx, (B, D_IN), dtype=jnp.float32)

    # Deterministic parameter init (PyTorch nn.Linear shapes: [out_features, in_features]).
    def init_w(k, out_f, in_f):
        bound = 1.0 / jnp.sqrt(in_f)
        return jax.random.uniform(k, (out_f, in_f), jnp.float32, -bound, bound)

    w1 = init_w(k1, D1, D_IN)
    w2 = init_w(k2, D2, D1)
    w3 = init_w(k3, D3, D2)
    w4 = init_w(k4, D_OUT, D3)

    params = prepare_params(w1, w2, w3, w4)  # one-time layout/dtype conversion

    out = neural_net_forward(x, params)
    out = jax.block_until_ready(out)
    assert out.shape == (B, D_OUT)

    # Reference 1: numerics-matched (bf16 operands, f32 accumulation) — tight-ish tolerance
    # (kernel output additionally passes through one bf16 store of the logits).
    h = x.astype(jnp.bfloat16)
    for w in (w1, w2, w3):
        h = jnp.dot(h, w.T.astype(jnp.bfloat16), preferred_element_type=jnp.float32)
        h = jnp.maximum(h, 0.0).astype(jnp.bfloat16)
    ref_bf16 = jnp.dot(h, w4.T.astype(jnp.bfloat16), preferred_element_type=jnp.float32)
    assert jnp.allclose(out, ref_bf16, atol=1e-2, rtol=2e-2)

    # Reference 2: pure f32 PyTorch semantics — loose tolerance (intentional bf16 quantization).
    ref_f32 = x
    for w in (w1, w2, w3):
        ref_f32 = jnp.maximum(ref_f32 @ w.T, 0.0)
    ref_f32 = ref_f32 @ w4.T
    assert jnp.allclose(out, ref_f32, atol=3e-2, rtol=3e-2)

    print("KERNEL_OK")
</pallas_src>

<mosaic_0001>
module attributes {stable_mosaic.version = 11 : i64} {
  func.func @mlp_kernel(%arg0: i32, %arg1: memref<8x784xf32, #tpu.memory_space<vmem>>, %arg2: memref<784x256xbf16, #tpu.memory_space<vmem>>, %arg3: memref<256x128xbf16, #tpu.memory_space<vmem>>, %arg4: memref<128x128xbf16, #tpu.memory_space<vmem>>, %arg5: memref<128x128xbf16, #tpu.memory_space<vmem>>, %arg6: memref<8x128xbf16, #tpu.memory_space<vmem>>) attributes {dimension_semantics = [#tpu.dimension_semantics<parallel>], iteration_bounds = array<i64: 1>, scalar_prefetch = 0 : i64, scratch_operands = 0 : i64, tpu.core_type = #tpu.core_type<tc>, window_params = [{transform_indices = @transform_0, window_bounds = array<i64: 8, 784>}, {pipeline_mode = #tpu.pipeline_mode<synchronous>, transform_indices = @transform_1, window_bounds = array<i64: 784, 256>}, {pipeline_mode = #tpu.pipeline_mode<synchronous>, transform_indices = @transform_2, window_bounds = array<i64: 256, 128>}, {pipeline_mode = #tpu.pipeline_mode<synchronous>, transform_indices = @transform_3, window_bounds = array<i64: 128, 128>}, {pipeline_mode = #tpu.pipeline_mode<synchronous>, transform_indices = @transform_4, window_bounds = array<i64: 128, 128>}, {transform_indices = @transform_5, window_bounds = array<i64: 8, 128>}]} {
    %c0 = arith.constant 0 : index
    %c0_0 = arith.constant 0 : index
    %0 = vector.load %arg1[%c0, %c0_0] : memref<8x784xf32, #tpu.memory_space<vmem>>, vector<8x784xf32>
    %1 = arith.truncf %0 : vector<8x784xf32> to vector<8x784xbf16>
    %c0_1 = arith.constant 0 : index
    %c0_2 = arith.constant 0 : index
    %2 = vector.load %arg2[%c0_1, %c0_2] : memref<784x256xbf16, #tpu.memory_space<vmem>>, vector<784x256xbf16>
    %cst = arith.constant dense<0.000000e+00> : vector<8x256xf32>
    %3 = tpu.matmul %1, %2, %cst {dimension_numbers = #tpu.dot_dimension_numbers<[1], [0], [0], [1], [0, 0, 1, 1], [], []>} : vector<8x784xbf16>, vector<784x256xbf16>, vector<8x256xf32> -> vector<8x256xf32>
    %cst_3 = arith.constant 0.000000e+00 : f32
    %4 = vector.broadcast %cst_3 : f32 to vector<8x256xf32>
    %5 = arith.maximumf %3, %4 : vector<8x256xf32>
    %6 = arith.truncf %5 : vector<8x256xf32> to vector<8x256xbf16>
    %c0_4 = arith.constant 0 : index
    %c0_5 = arith.constant 0 : index
    %7 = vector.load %arg3[%c0_4, %c0_5] : memref<256x128xbf16, #tpu.memory_space<vmem>>, vector<256x128xbf16>
    %cst_6 = arith.constant dense<0.000000e+00> : vector<8x128xf32>
    %8 = tpu.matmul %6, %7, %cst_6 {dimension_numbers = #tpu.dot_dimension_numbers<[1], [0], [0], [1], [0, 0, 1, 1], [], []>} : vector<8x256xbf16>, vector<256x128xbf16>, vector<8x128xf32> -> vector<8x128xf32>
    %cst_7 = arith.constant 0.000000e+00 : f32
    %9 = vector.broadcast %cst_7 : f32 to vector<8x128xf32>
    %10 = arith.maximumf %8, %9 : vector<8x128xf32>
    %11 = arith.truncf %10 : vector<8x128xf32> to vector<8x128xbf16>
    %c0_8 = arith.constant 0 : index
    %c0_9 = arith.constant 0 : index
    %12 = vector.load %arg4[%c0_8, %c0_9] : memref<128x128xbf16, #tpu.memory_space<vmem>>, vector<128x128xbf16>
    %cst_10 = arith.constant dense<0.000000e+00> : vector<8x128xf32>
    %13 = tpu.matmul %11, %12, %cst_10 {dimension_numbers = #tpu.dot_dimension_numbers<[1], [0], [0], [1], [0, 0, 1, 1], [], []>} : vector<8x128xbf16>, vector<128x128xbf16>, vector<8x128xf32> -> vector<8x128xf32>
    %cst_11 = arith.constant 0.000000e+00 : f32
    %14 = vector.broadcast %cst_11 : f32 to vector<8x128xf32>
    %15 = arith.maximumf %13, %14 : vector<8x128xf32>
    %16 = arith.truncf %15 : vector<8x128xf32> to vector<8x128xbf16>
    %c0_12 = arith.constant 0 : index
    %c0_13 = arith.constant 0 : index
    %17 = vector.load %arg5[%c0_12, %c0_13] : memref<128x128xbf16, #tpu.memory_space<vmem>>, vector<128x128xbf16>
    %cst_14 = arith.constant dense<0.000000e+00> : vector<8x128xf32>
    %18 = tpu.matmul %16, %17, %cst_14 {dimension_numbers = #tpu.dot_dimension_numbers<[1], [0], [0], [1], [0, 0, 1, 1], [], []>} : vector<8x128xbf16>, vector<128x128xbf16>, vector<8x128xf32> -> vector<8x128xf32>
    %19 = arith.truncf %18 : vector<8x128xf32> to vector<8x128xbf16>
    %c0_15 = arith.constant 0 : index
    %c0_16 = arith.constant 0 : index
    %20 = vector.load %arg6[%c0_15, %c0_16] : memref<8x128xbf16, #tpu.memory_space<vmem>>, vector<8x128xbf16>
    tpu.vector_store %arg6[%c0_15, %c0_16], %19 {strides = array<i32>} : memref<8x128xbf16, #tpu.memory_space<vmem>>, vector<8x128xbf16>,
    return
  }
  func.func @transform_0(%arg0: i32) -> (i32, i32) {
    %c0_i32 = arith.constant 0 : i32
    %c0_i32_0 = arith.constant 0 : i32
    return %arg0, %c0_i32 : i32, i32
  }
  func.func @transform_1(%arg0: i32) -> (i32, i32) {
    %c0_i32 = arith.constant 0 : i32
    %c0_i32_0 = arith.constant 0 : i32
    %c0_i32_1 = arith.constant 0 : i32
    return %c0_i32, %c0_i32_0 : i32, i32
  }
  func.func @transform_2(%arg0: i32) -> (i32, i32) {
    %c0_i32 = arith.constant 0 : i32
    %c0_i32_0 = arith.constant 0 : i32
    %c0_i32_1 = arith.constant 0 : i32
    return %c0_i32, %c0_i32_0 : i32, i32
  }
  func.func @transform_3(%arg0: i32) -> (i32, i32) {
    %c0_i32 = arith.constant 0 : i32
    %c0_i32_0 = arith.constant 0 : i32
    %c0_i32_1 = arith.constant 0 : i32
    return %c0_i32, %c0_i32_0 : i32, i32
  }
  func.func @transform_4(%arg0: i32) -> (i32, i32) {
    %c0_i32 = arith.constant 0 : i32
    %c0_i32_0 = arith.constant 0 : i32
    %c0_i32_1 = arith.constant 0 : i32
    return %c0_i32, %c0_i32_0 : i32, i32
  }
  func.func @transform_5(%arg0: i32) -> (i32, i32) {
    %c0_i32 = arith.constant 0 : i32
    %c0_i32_0 = arith.constant 0 : i32
    return %arg0, %c0_i32 : i32, i32
  }
}

</mosaic_0001>

<llo_original>
// kernel: tpu_custom_call.1
$region0: #{tpu_custom_call.1}
  #allocation0 [shape = 'u32[]', space=smem, size = 0x4, offset = 0x4, fixed_abs, tag = 'smem constant byte address 0x4 - core index']
  #allocation1 [shape = 'u32[72,128]{1,0:T(1,128)}', space=vmem, size = 0x9000, scoped, tag = 'internal scratch']
  %s0 = inlined_call_operand.hbm [shape: f32[8,784], index: 0, kind: input, shape index: {}]
  %s1 = inlined_call_operand.hbm [shape: bf16[784,256], index: 1, kind: input, shape index: {}]
  %s2 = inlined_call_operand.hbm [shape: bf16[256,128], index: 2, kind: input, shape index: {}]
  %s3 = inlined_call_operand.hbm [shape: bf16[128,128], index: 3, kind: input, shape index: {}]
  %s4 = inlined_call_operand.hbm [shape: bf16[128,128], index: 4, kind: input, shape index: {}]
  %s5 = inlined_call_operand.hbm [shape: bf16[8,128], index: 5, kind: output, shape index: {}]
  %s6 = sld [smem:[#allocation0]]
  $region50: #{tpu_custom_call.1} parent=0
    _
  %s8 = ssub.s32 1, %s6
  %s9 = scalar_select 0, %s8, %s6
  $region1: #{tpu_custom_call.1} parent=0
    #allocation2 [shape = 'u8[28672]{0}', space=vmem, size = 0x7000, scoped, tag = 'input window, operand 0, single buffered']
    #allocation3 [shape = 's32[1]{0}', space=sflag, size = 0x4, scoped, tag = 'scoped memory for tpu_custom_call.1']
    #allocation4 [shape = 's32[1]{0}', space=sflag, size = 0x4, scoped, tag = 'scoped memory for tpu_custom_call.1']
    #allocation5 [shape = 'u8[401408]{0}', space=vmem, size = 0x62000, scoped, tag = 'input window, operand 1, single buffered']
    #allocation6 [shape = 's32[1]{0}', space=sflag, size = 0x4, scoped, tag = 'scoped memory for tpu_custom_call.1']
    #allocation7 [shape = 'u8[65536]{0}', space=vmem, size = 0x10000, scoped, tag = 'input window, operand 2, single buffered']
    #allocation8 [shape = 'u8[32768]{0}', space=vmem, size = 0x8000, scoped, tag = 'input window, operand 3, single buffered']
    #allocation9 [shape = 's32[1]{0}', space=sflag, size = 0x4, scoped, tag = 'scoped memory for tpu_custom_call.1']
    #allocation10 [shape = 'u8[32768]{0}', space=vmem, size = 0x8000, scoped, tag = 'input window, operand 4, single buffered']
    #allocation11 [shape = 'u8[2048]{0}', space=vmem, size = 0x800, scoped, tag = 'output window, operand 0, single buffered']
    %10 = vsyncpa [#allocation3], 0
    %11 = vsyncpa [#allocation6], 0
    %12 = vsyncpa [#allocation9], 0
    %13 = vsyncpa [#allocation4], 0
    // Predicated region
    $region2: #{tpu_custom_call.1} parent=1 // pred_check
      _
    $region3: #{tpu_custom_call.1} parent=1 // pred_check_branch
      %15 = sbr.rel (0) target = $region5
    $region4: #{tpu_custom_call.1} parent=1 // pred_region
      %17 = vsyncadd [#allocation3], 0
      %s19 = sshll.u32 %s0, 4
      %s20 = int_to_ptr.hbm [resolvable:$true] %s19
      %s21 = sshll.u32 [#allocation2], 4
      %s22 = int_to_ptr.vmem [resolvable:$true] %s21
      %24 = dma.hbm_to_vmem [thread:$0]  %s20, 896, %s22, [#allocation3]
    $region5: #{tpu_custom_call.1} parent=1 // pred_fallthru
      _
    // Predicated region
    $region6: #{tpu_custom_call.1} parent=1 // pred_check
      _
    $region7: #{tpu_custom_call.1} parent=1 // pred_check_branch
      %26 = sbr.rel (0) target = $region9
    $region8: #{tpu_custom_call.1} parent=1 // pred_region
      %28 = vsyncadd [#allocation6], 0
      %s29 = sshll.u32 %s1, 4
      %s30 = int_to_ptr.hbm [resolvable:$true] %s29
      %s31 = sshll.u32 [#allocation5], 4
      %s32 = int_to_ptr.vmem [resolvable:$true] %s31
      %37 = dma.hbm_to_vmem [thread:$0]  %s30, 12544, %s32, [#allocation6], 128, 128, 8
    $region9: #{tpu_custom_call.1} parent=1 // pred_fallthru
      _
    // Predicated region
    $region10: #{tpu_custom_call.1} parent=1 // pred_check
      _
    $region11: #{tpu_custom_call.1} parent=1 // pred_check_branch
      %39 = sbr.rel (0) target = $region13
    $region12: #{tpu_custom_call.1} parent=1 // pred_region
      %41 = vsyncadd [#allocation6], 0
      %s42 = sshll.u32 %s2, 4
      %s43 = int_to_ptr.hbm [resolvable:$true] %s42
      %s44 = sshll.u32 [#allocation7], 4
      %s45 = int_to_ptr.vmem [resolvable:$true] %s44
      %50 = dma.hbm_to_vmem [thread:$0]  %s43, 2048, %s45, [#allocation6], 64, 64, 4
    $region13: #{tpu_custom_call.1} parent=1 // pred_fallthru
      _
    // Predicated region
    $region14: #{tpu_custom_call.1} parent=1 // pred_check
      _
    $region15: #{tpu_custom_call.1} parent=1 // pred_check_branch
      %52 = sbr.rel (0) target = $region17
    $region16: #{tpu_custom_call.1} parent=1 // pred_region
      %54 = vsyncadd [#allocation9], 0
      %s55 = sshll.u32 %s3, 4
      %s56 = int_to_ptr.hbm [resolvable:$true] %s55
      %s57 = sshll.u32 [#allocation8], 4
      %s58 = int_to_ptr.vmem [resolvable:$true] %s57
      %63 = dma.hbm_to_vmem [thread:$0]  %s56, 1024, %s58, [#allocation9], 64, 64, 4
    $region17: #{tpu_custom_call.1} parent=1 // pred_fallthru
      _
    // Predicated region
    $region18: #{tpu_custom_call.1} parent=1 // pred_check
      _
    $region19: #{tpu_custom_call.1} parent=1 // pred_check_branch
      %65 = sbr.rel (0) target = $region21
    $region20: #{tpu_custom_call.1} parent=1 // pred_region
      %67 = vsyncadd [#allocation9], 0
      %s68 = sshll.u32 %s4, 4
      %s69 = int_to_ptr.hbm [resolvable:$true] %s68
      %s70 = sshll.u32 [#allocation10], 4
      %s71 = int_to_ptr.vmem [resolvable:$true] %s70
      %76 = dma.hbm_to_vmem [thread:$0]  %s69, 1024, %s71, [#allocation9], 64, 64, 4
    $region21: #{tpu_custom_call.1} parent=1 // pred_fallthru
      _
    // Predicated region
    $region22: #{tpu_custom_call.1} parent=1 // pred_check
      _
    $region23: #{tpu_custom_call.1} parent=1 // pred_check_branch
      %78 = sbr.rel (0) target = $region25
    $region24: #{tpu_custom_call.1} parent=1 // pred_region
      %80 = dma.done [#allocation3], 896
    $region25: #{tpu_custom_call.1} parent=1 // pred_fallthru
      _
    // Predicated region
    $region26: #{tpu_custom_call.1} parent=1 // pred_check
      _
    $region27: #{tpu_custom_call.1} parent=1 // pred_check_branch
      %82 = sbr.rel (0) target = $region29
    $region28: #{tpu_custom_call.1} parent=1 // pred_region
      %84 = dma.done [#allocation6], 12544
    $region29: #{tpu_custom_call.1} parent=1 // pred_fallthru
      _
    // Predicated region
    $region30: #{tpu_custom_call.1} parent=1 // pred_check
      _
    $region31: #{tpu_custom_call.1} parent=1 // pred_check_branch
      %86 = sbr.rel (0) target = $region33
    $region32: #{tpu_custom_call.1} parent=1 // pred_region
      %88 = dma.done [#allocation6], 2048
    $region33: #{tpu_custom_call.1} parent=1 // pred_fallthru
      _
    // Predicated region
    $region34: #{tpu_custom_call.1} parent=1 // pred_check
      _
    $region35: #{tpu_custom_call.1} parent=1 // pred_check_branch
      %90 = sbr.rel (0) target = $region37
    $region36: #{tpu_custom_call.1} parent=1 // pred_region
      %92 = dma.done [#allocation9], 1024
    $region37: #{tpu_custom_call.1} parent=1 // pred_fallthru
      _
    // Predicated region
    $region38: #{tpu_custom_call.1} parent=1 // pred_check
      _
    $region39: #{tpu_custom_call.1} parent=1 // pred_check_branch
      %94 = sbr.rel (0) target = $region41
    $region40: #{tpu_custom_call.1} parent=1 // pred_region
      %96 = dma.done [#allocation9], 1024
    $region41: #{tpu_custom_call.1} parent=1 // pred_fallthru
      _
    %v98 = vld [vmem:[#allocation2] sm:$0xff]
    %v99 = vld [vmem:[#allocation2 + $0x8] sm:$0xff]
    %v100 = vld [vmem:[#allocation2 + $0x10] sm:$0xff]
    %v101 = vld [vmem:[#allocation2 + $0x18] sm:$0xff]
    %v102 = vld [vmem:[#allocation2 + $0x20] sm:$0xff]
    %v103 = vld [vmem:[#allocation2 + $0x28] sm:$0xff]
    %v104 = vld [vmem:[#allocation2 + $0x30] sm:$0xff]
    %v105 = vpack.c.bf16 %v98, %v98
    %v106 = vpack.c.bf16 %v99, %v99
    %v107 = vpack.c.bf16 %v100, %v100
    %v108 = vpack.c.bf16 %v101, %v101
    %v109 = vpack.c.bf16 %v102, %v102
    %v110 = vpack.c.bf16 %v103, %v103
    %v111 = vpack.c.bf16 %v104, %v104
    %v112 = vld [vmem:[#allocation5] sm:$0xff]
    %v113 = vld [vmem:[#allocation5 + $0x8] sm:$0xff]
    %v114 = vld [vmem:[#allocation5 + $0x10] sm:$0xff]
    %v115 = vld [vmem:[#allocation5 + $0x18] sm:$0xff]
    %v116 = vld [vmem:[#allocation5 + $0x20] sm:$0xff]
    %v117 = vld [vmem:[#allocation5 + $0x28] sm:$0xff]
    %v118 = vld [vmem:[#allocation5 + $0x30] sm:$0xff]
    %v119 = vld [vmem:[#allocation5 + $0x38] sm:$0xff]
    %v120 = vld [vmem:[#allocation5 + $0x40] sm:$0xff]
    %v121 = vld [vmem:[#allocation5 + $0x48] sm:$0xff]
    %v122 = vld [vmem:[#allocation5 + $0x50] sm:$0xff]
    %v123 = vld [vmem:[#allocation5 + $0x58] sm:$0xff]
    %v124 = vld [vmem:[#allocation5 + $0x60] sm:$0xff]
    %v125 = vld [vmem:[#allocation5 + $0x68] sm:$0xff]
    %v126 = vld [vmem:[#allocation5 + $0x70] sm:$0xff]
    %v127 = vld [vmem:[#allocation5 + $0x78] sm:$0xff]
    %v128 = vld [vmem:[#allocation5 + $0x80] sm:$0xff]
    %v129 = vld [vmem:[#allocation5 + $0x88] sm:$0xff]
    %v130 = vld [vmem:[#allocation5 + $0x90] sm:$0xff]
    %v131 = vld [vmem:[#allocation5 + $0x98] sm:$0xff]
    %v132 = vld [vmem:[#allocation5 + $0xa0] sm:$0xff]
    %v133 = vld [vmem:[#allocation5 + $0xa8] sm:$0xff]
    %v134 = vld [vmem:[#allocation5 + $0xb0] sm:$0xff]
    %v135 = vld [vmem:[#allocation5 + $0xb8] sm:$0xff]
    %v136 = vld [vmem:[#allocation5 + $0xc0] sm:$0xff]
    %v137 = vld [vmem:[#allocation5 + $0xc8] sm:$0xff]
    %v138 = vld [vmem:[#allocation5 + $0xd0] sm:$0xff]
    %v139 = vld [vmem:[#allocation5 + $0xd8] sm:$0xff]
    %v140 = vld [vmem:[#allocation5 + $0xe0] sm:$0xff]
    %v141 = vld [vmem:[#allocation5 + $0xe8] sm:$0xff]
    %v142 = vld [vmem:[#allocation5 + $0xf0] sm:$0xff]
    %v143 = vld [vmem:[#allocation5 + $0xf8] sm:$0xff]
    %v144 = vld [vmem:[#allocation5 + $0x100] sm:$0xff]
    %v145 = vld [vmem:[#allocation5 + $0x108] sm:$0xff]
    %v146 = vld [vmem:[#allocation5 + $0x110] sm:$0xff]
    %v147 = vld [vmem:[#allocation5 + $0x118] sm:$0xff]
    %v148 = vld [vmem:[#allocation5 + $0x120] sm:$0xff]
    %v149 = vld [vmem:[#allocation5 + $0x128] sm:$0xff]
    %v150 = vld [vmem:[#allocation5 + $0x130] sm:$0xff]
    %v151 = vld [vmem:[#allocation5 + $0x138] sm:$0xff]
    %v152 = vld [vmem:[#allocation5 + $0x140] sm:$0xff]
    %v153 = vld [vmem:[#allocation5 + $0x148] sm:$0xff]
    %v154 = vld [vmem:[#allocation5 + $0x150] sm:$0xff]
    %v155 = vld [vmem:[#allocation5 + $0x158] sm:$0xff]
    %v156 = vld [vmem:[#allocation5 + $0x160] sm:$0xff]
    %v157 = vld [vmem:[#allocation5 + $0x168] sm:$0xff]
    %v158 = vld [vmem:[#allocation5 + $0x170] sm:$0xff]
    %v159 = vld [vmem:[#allocation5 + $0x178] sm:$0xff]
    %v160 = vld [vmem:[#allocation5 + $0x180] sm:$0xff]
    %v161 = vld [vmem:[#allocation5 + $0x188] sm:$0xff]
    %v162 = vld [vmem:[#allocation5 + $0x190] sm:$0xff]
    %v163 = vld [vmem:[#allocation5 + $0x198] sm:$0xff]
    %v164 = vld [vmem:[#allocation5 + $0x1a0] sm:$0xff]
    %v165 = vld [vmem:[#allocation5 + $0x1a8] sm:$0xff]
    %v166 = vld [vmem:[#allocation5 + $0x1b0] sm:$0xff]
    %v167 = vld [vmem:[#allocation5 + $0x1b8] sm:$0xff]
    %v168 = vld [vmem:[#allocation5 + $0x1c0] sm:$0xff]
    %v169 = vld [vmem:[#allocation5 + $0x1c8] sm:$0xff]
    %v170 = vld [vmem:[#allocation5 + $0x1d0] sm:$0xff]
    %v171 = vld [vmem:[#allocation5 + $0x1d8] sm:$0xff]
    %v172 = vld [vmem:[#allocation5 + $0x1e0] sm:$0xff]
    %v173 = vld [vmem:[#allocation5 + $0x1e8] sm:$0xff]
    %v174 = vld [vmem:[#allocation5 + $0x1f0] sm:$0xff]
    %v175 = vld [vmem:[#allocation5 + $0x1f8] sm:$0xff]
    %v176 = vld [vmem:[#allocation5 + $0x200] sm:$0xff]
    %v177 = vld [vmem:[#allocation5 + $0x208] sm:$0xff]
    %v178 = vld [vmem:[#allocation5 + $0x210] sm:$0xff]
    %v179 = vld [vmem:[#allocation5 + $0x218] sm:$0xff]
    %v180 = vld [vmem:[#allocation5 + $0x220] sm:$0xff]
    %v181 = vld [vmem:[#allocation5 + $0x228] sm:$0xff]
    %v182 = vld [vmem:[#allocation5 + $0x230] sm:$0xff]
    %v183 = vld [vmem:[#allocation5 + $0x238] sm:$0xff]
    %v184 = vld [vmem:[#allocation5 + $0x240] sm:$0xff]
    %v185 = vld [vmem:[#allocation5 + $0x248] sm:$0xff]
    %v186 = vld [vmem:[#allocation5 + $0x250] sm:$0xff]
    %v187 = vld [vmem:[#allocation5 + $0x258] sm:$0xff]
    %v188 = vld [vmem:[#allocation5 + $0x260] sm:$0xff]
    %v189 = vld [vmem:[#allocation5 + $0x268] sm:$0xff]
    %v190 = vld [vmem:[#allocation5 + $0x270] sm:$0xff]
    %v191 = vld [vmem:[#allocation5 + $0x278] sm:$0xff]
    %v192 = vld [vmem:[#allocation5 + $0x280] sm:$0xff]
    %v193 = vld [vmem:[#allocation5 + $0x288] sm:$0xff]
    %v194 = vld [vmem:[#allocation5 + $0x290] sm:$0xff]
    %v195 = vld [vmem:[#allocation5 + $0x298] sm:$0xff]
    %v196 = vld [vmem:[#allocation5 + $0x2a0] sm:$0xff]
    %v197 = vld [vmem:[#allocation5 + $0x2a8] sm:$0xff]
    %v198 = vld [vmem:[#allocation5 + $0x2b0] sm:$0xff]
    %v199 = vld [vmem:[#allocation5 + $0x2b8] sm:$0xff]
    %v200 = vld [vmem:[#allocation5 + $0x2c0] sm:$0xff]
    %v201 = vld [vmem:[#allocation5 + $0x2c8] sm:$0xff]
    %v202 = vld [vmem:[#allocation5 + $0x2d0] sm:$0xff]
    %v203 = vld [vmem:[#allocation5 + $0x2d8] sm:$0xff]
    %v204 = vld [vmem:[#allocation5 + $0x2e0] sm:$0xff]
    %v205 = vld [vmem:[#allocation5 + $0x2e8] sm:$0xff]
    %v206 = vld [vmem:[#allocation5 + $0x2f0] sm:$0xff]
    %v207 = vld [vmem:[#allocation5 + $0x2f8] sm:$0xff]
    %v208 = vld [vmem:[#allocation5 + $0x300] sm:$0xff]
    %v209 = vld [vmem:[#allocation5 + $0x308] sm:$0xff]
    %v308 = vunpack.c.l.b16 %v112
    %v309 = vunpack.c.h.b16 %v112
    %v310 = vunpack.c.l.b16 %v113
    %v311 = vunpack.c.h.b16 %v113
    %v312 = vunpack.c.l.b16 %v114
    %v313 = vunpack.c.h.b16 %v114
    %v314 = vunpack.c.l.b16 %v115
    %v315 = vunpack.c.h.b16 %v115
    %v316 = vunpack.c.l.b16 %v116
    %v317 = vunpack.c.h.b16 %v116
    %v318 = vunpack.c.l.b16 %v117
    %v319 = vunpack.c.h.b16 %v117
    %v320 = vunpack.c.l.b16 %v118
    %v321 = vunpack.c.h.b16 %v118
    %v322 = vunpack.c.l.b16 %v119
    %v323 = vunpack.c.h.b16 %v119
    %v324 = vunpack.c.l.b16 %v120
    %v325 = vunpack.c.h.b16 %v120
    %v326 = vunpack.c.l.b16 %v121
    %v327 = vunpack.c.h.b16 %v121
    %v328 = vunpack.c.l.b16 %v122
    %v329 = vunpack.c.h.b16 %v122
    %v330 = vunpack.c.l.b16 %v123
    %v331 = vunpack.c.h.b16 %v123
    %v332 = vunpack.c.l.b16 %v124
    %v333 = vunpack.c.h.b16 %v124
    %v334 = vunpack.c.l.b16 %v125
    %v335 = vunpack.c.h.b16 %v125
    %v336 = vunpack.c.l.b16 %v126
    %v337 = vunpack.c.h.b16 %v126
    %v338 = vunpack.c.l.b16 %v127
    %v339 = vunpack.c.h.b16 %v127
    %v340 = vunpack.c.l.b16 %v128
    %v341 = vunpack.c.h.b16 %v128
    %v342 = vunpack.c.l.b16 %v129
    %v343 = vunpack.c.h.b16 %v129
    %v344 = vunpack.c.l.b16 %v130
    %v345 = vunpack.c.h.b16 %v130
    %v346 = vunpack.c.l.b16 %v131
    %v347 = vunpack.c.h.b16 %v131
    %v348 = vunpack.c.l.b16 %v132
    %v349 = vunpack.c.h.b16 %v132
    %v350 = vunpack.c.l.b16 %v133
    %v351 = vunpack.c.h.b16 %v133
    %v352 = vunpack.c.l.b16 %v134
    %v353 = vunpack.c.h.b16 %v134
    %v354 = vunpack.c.l.b16 %v135
    %v355 = vunpack.c.h.b16 %v135
    %v356 = vunpack.c.l.b16 %v136
    %v357 = vunpack.c.h.b16 %v136
    %v358 = vunpack.c.l.b16 %v137
    %v359 = vunpack.c.h.b16 %v137
    %v360 = vunpack.c.l.b16 %v138
    %v361 = vunpack.c.h.b16 %v138
    %v362 = vunpack.c.l.b16 %v139
    %v363 = vunpack.c.h.b16 %v139
    %v364 = vunpack.c.l.b16 %v140
    %v365 = vunpack.c.h.b16 %v140
    %v366 = vunpack.c.l.b16 %v141
    %v367 = vunpack.c.h.b16 %v141
    %v368 = vunpack.c.l.b16 %v142
    %v369 = vunpack.c.h.b16 %v142
    %v370 = vunpack.c.l.b16 %v143
    %v371 = vunpack.c.h.b16 %v143
    %v372 = vunpack.c.l.b16 %v144
    %v373 = vunpack.c.h.b16 %v144
    %v374 = vunpack.c.l.b16 %v145
    %v375 = vunpack.c.h.b16 %v145
    %v376 = vunpack.c.l.b16 %v146
    %v377 = vunpack.c.h.b16 %v146
    %v378 = vunpack.c.l.b16 %v147
    %v379 = vunpack.c.h.b16 %v147
    %v380 = vunpack.c.l.b16 %v148
    %v381 = vunpack.c.h.b16 %v148
    %v382 = vunpack.c.l.b16 %v149
    %v383 = vunpack.c.h.b16 %v149
    %v384 = vunpack.c.l.b16 %v150
    %v385 = vunpack.c.h.b16 %v150
    %v386 = vunpack.c.l.b16 %v151
    %v387 = vunpack.c.h.b16 %v151
    %v388 = vunpack.c.l.b16 %v152
    %v389 = vunpack.c.h.b16 %v152
    %v390 = vunpack.c.l.b16 %v153
    %v391 = vunpack.c.h.b16 %v153
    %v392 = vunpack.c.l.b16 %v154
    %v393 = vunpack.c.h.b16 %v154
    %v394 = vunpack.c.l.b16 %v155
    %v395 = vunpack.c.h.b16 %v155
    %v396 = vunpack.c.l.b16 %v156
    %v397 = vunpack.c.h.b16 %v156
    %v398 = vunpack.c.l.b16 %v157
    %v399 = vunpack.c.h.b16 %v157
    %v400 = vunpack.c.l.b16 %v158
    %v401 = vunpack.c.h.b16 %v158
    %v402 = vunpack.c.l.b16 %v159
    %v403 = vunpack.c.h.b16 %v159
    %v404 = vunpack.c.l.b16 %v160
    %v405 = vunpack.c.h.b16 %v160
    %v406 = vunpack.c.l.b16 %v161
    %v407 = vunpack.c.h.b16 %v161
    %v408 = vunpack.c.l.b16 %v162
    %v409 = vunpack.c.h.b16 %v162
    %v410 = vunpack.c.l.b16 %v163
    %v411 = vunpack.c.h.b16 %v163
    %v412 = vunpack.c.l.b16 %v164
    %v413 = vunpack.c.h.b16 %v164
    %v414 = vunpack.c.l.b16 %v165
    %v415 = vunpack.c.h.b16 %v165
    %v416 = vunpack.c.l.b16 %v166
    %v417 = vunpack.c.h.b16 %v166
    %v418 = vunpack.c.l.b16 %v167
    %v419 = vunpack.c.h.b16 %v167
    %v420 = vunpack.c.l.b16 %v168
    %v421 = vunpack.c.h.b16 %v168
    %v422 = vunpack.c.l.b16 %v169
    %v423 = vunpack.c.h.b16 %v169
    %v424 = vunpack.c.l.b16 %v170
    %v425 = vunpack.c.h.b16 %v170
    %v426 = vunpack.c.l.b16 %v171
    %v427 = vunpack.c.h.b16 %v171
    %v428 = vunpack.c.l.b16 %v172
    %v429 = vunpack.c.h.b16 %v172
    %v430 = vunpack.c.l.b16 %v173
    %v431 = vunpack.c.h.b16 %v173
    %v432 = vunpack.c.l.b16 %v174
    %v433 = vunpack.c.h.b16 %v174
    %v434 = vunpack.c.l.b16 %v175
    %v435 = vunpack.c.h.b16 %v175
    %v436 = vunpack.c.l.b16 %v176
    %v437 = vunpack.c.h.b16 %v176
    %v438 = vunpack.c.l.b16 %v177
    %v439 = vunpack.c.h.b16 %v177
    %v440 = vunpack.c.l.b16 %v178
    %v441 = vunpack.c.h.b16 %v178
    %v442 = vunpack.c.l.b16 %v179
    %v443 = vunpack.c.h.b16 %v179
    %v444 = vunpack.c.l.b16 %v180
    %v445 = vunpack.c.h.b16 %v180
    %v446 = vunpack.c.l.b16 %v181
    %v447 = vunpack.c.h.b16 %v181
    %v448 = vunpack.c.l.b16 %v182
    %v449 = vunpack.c.h.b16 %v182
    %v450 = vunpack.c.l.b16 %v183
    %v451 = vunpack.c.h.b16 %v183
    %v452 = vunpack.c.l.b16 %v184
    %v453 = vunpack.c.h.b16 %v184
    %v454 = vunpack.c.l.b16 %v185
    %v455 = vunpack.c.h.b16 %v185
    %v456 = vunpack.c.l.b16 %v186
    %v457 = vunpack.c.h.b16 %v186
    %v458 = vunpack.c.l.b16 %v187
    %v459 = vunpack.c.h.b16 %v187
    %v460 = vunpack.c.l.b16 %v188
    %v461 = vunpack.c.h.b16 %v188
    %v462 = vunpack.c.l.b16 %v189
    %v463 = vunpack.c.h.b16 %v189
    %v464 = vunpack.c.l.b16 %v190
    %v465 = vunpack.c.h.b16 %v190
    %v466 = vunpack.c.l.b16 %v191
    %v467 = vunpack.c.h.b16 %v191
    %v468 = vunpack.c.l.b16 %v192
    %v469 = vunpack.c.h.b16 %v192
    %v470 = vunpack.c.l.b16 %v193
    %v471 = vunpack.c.h.b16 %v193
    %v472 = vunpack.c.l.b16 %v194
    %v473 = vunpack.c.h.b16 %v194
    %v474 = vunpack.c.l.b16 %v195
    %v475 = vunpack.c.h.b16 %v195
    %v476 = vunpack.c.l.b16 %v196
    %v477 = vunpack.c.h.b16 %v196
    %v478 = vunpack.c.l.b16 %v197
    %v479 = vunpack.c.h.b16 %v197
    %v480 = vunpack.c.l.b16 %v198
    %v481 = vunpack.c.h.b16 %v198
    %v482 = vunpack.c.l.b16 %v199
    %v483 = vunpack.c.h.b16 %v199
    %v484 = vunpack.c.l.b16 %v200
    %v485 = vunpack.c.h.b16 %v200
    %v486 = vunpack.c.l.b16 %v201
    %v487 = vunpack.c.h.b16 %v201
    %v488 = vunpack.c.l.b16 %v202
    %v489 = vunpack.c.h.b16 %v202
    %v490 = vunpack.c.l.b16 %v203
    %v491 = vunpack.c.h.b16 %v203
    %v492 = vunpack.c.l.b16 %v204
    %v493 = vunpack.c.h.b16 %v204
    %v494 = vunpack.c.l.b16 %v205
    %v495 = vunpack.c.h.b16 %v205
    %v496 = vunpack.c.l.b16 %v206
    %v497 = vunpack.c.h.b16 %v206
    %v498 = vunpack.c.l.b16 %v207
    %v499 = vunpack.c.h.b16 %v207
    %v500 = vunpack.c.l.b16 %v208
    %v501 = vunpack.c.h.b16 %v208
    %v502 = vunpack.c.l.b16 %v209
    %v503 = vunpack.c.h.b16 %v209
    %v504 = vpack.c.b16 %v310, %v308
    %v505 = vpack.c.b16 %v311, %v309
    %v506 = vpack.c.b16 %v314, %v312
    %v507 = vpack.c.b16 %v315, %v313
    %v508 = vpack.c.b16 %v318, %v316
    %v509 = vpack.c.b16 %v319, %v317
    %v510 = vpack.c.b16 %v322, %v320
    %v511 = vpack.c.b16 %v323, %v321
    %v512 = vpack.c.b16 %v326, %v324
    %v513 = vpack.c.b16 %v327, %v325
    %v514 = vpack.c.b16 %v330, %v328
    %v515 = vpack.c.b16 %v331, %v329
    %v516 = vpack.c.b16 %v334, %v332
    %v517 = vpack.c.b16 %v335, %v333
    %v518 = vpack.c.b16 %v338, %v336
    %v519 = vpack.c.b16 %v339, %v337
    %v520 = vpack.c.b16 %v342, %v340
    %v521 = vpack.c.b16 %v343, %v341
    %v522 = vpack.c.b16 %v346, %v344
    %v523 = vpack.c.b16 %v347, %v345
    %v524 = vpack.c.b16 %v350, %v348
    %v525 = vpack.c.b16 %v351, %v349
    %v526 = vpack.c.b16 %v354, %v352
    %v527 = vpack.c.b16 %v355, %v353
    %v528 = vpack.c.b16 %v358, %v356
    %v529 = vpack.c.b16 %v359, %v357
    %v530 = vpack.c.b16 %v362, %v360
    %v531 = vpack.c.b16 %v363, %v361
    %v532 = vpack.c.b16 %v366, %v364
    %v533 = vpack.c.b16 %v367, %v365
    %v534 = vpack.c.b16 %v370, %v368
    %v535 = vpack.c.b16 %v371, %v369
    %v536 = vpack.c.b16 %v374, %v372
    %v537 = vpack.c.b16 %v375, %v373
    %v538 = vpack.c.b16 %v378, %v376
    %v539 = vpack.c.b16 %v379, %v377
    %v540 = vpack.c.b16 %v382, %v380
    %v541 = vpack.c.b16 %v383, %v381
    %v542 = vpack.c.b16 %v386, %v384
    %v543 = vpack.c.b16 %v387, %v385
    %v544 = vpack.c.b16 %v390, %v388
    %v545 = vpack.c.b16 %v391, %v389
    %v546 = vpack.c.b16 %v394, %v392
    %v547 = vpack.c.b16 %v395, %v393
    %v548 = vpack.c.b16 %v398, %v396
    %v549 = vpack.c.b16 %v399, %v397
    %v550 = vpack.c.b16 %v402, %v400
    %v551 = vpack.c.b16 %v403, %v401
    %v552 = vpack.c.b16 %v406, %v404
    %v553 = vpack.c.b16 %v407, %v405
    %v554 = vpack.c.b16 %v410, %v408
    %v555 = vpack.c.b16 %v411, %v409
    %v556 = vpack.c.b16 %v414, %v412
    %v557 = vpack.c.b16 %v415, %v413
    %v558 = vpack.c.b16 %v418, %v416
    %v559 = vpack.c.b16 %v419, %v417
    %v560 = vpack.c.b16 %v422, %v420
    %v561 = vpack.c.b16 %v423, %v421
    %v562 = vpack.c.b16 %v426, %v424
    %v563 = vpack.c.b16 %v427, %v425
    %v564 = vpack.c.b16 %v430, %v428
    %v565 = vpack.c.b16 %v431, %v429
    %v566 = vpack.c.b16 %v434, %v432
    %v567 = vpack.c.b16 %v435, %v433
    %v568 = vpack.c.b16 %v438, %v436
    %v569 = vpack.c.b16 %v439, %v437
    %v570 = vpack.c.b16 %v442, %v440
    %v571 = vpack.c.b16 %v443, %v441
    %v572 = vpack.c.b16 %v446, %v444
    %v573 = vpack.c.b16 %v447, %v445
    %v574 = vpack.c.b16 %v450, %v448
    %v575 = vpack.c.b16 %v451, %v449
    %v576 = vpack.c.b16 %v454, %v452
    %v577 = vpack.c.b16 %v455, %v453
    %v578 = vpack.c.b16 %v458, %v456
    %v579 = vpack.c.b16 %v459, %v457
    %v580 = vpack.c.b16 %v462, %v460
    %v581 = vpack.c.b16 %v463, %v461
    %v582 = vpack.c.b16 %v466, %v464
    %v583 = vpack.c.b16 %v467, %v465
    %v584 = vpack.c.b16 %v470, %v468
    %v585 = vpack.c.b16 %v471, %v469
    %v586 = vpack.c.b16 %v474, %v472
    %v587 = vpack.c.b16 %v475, %v473
    %v588 = vpack.c.b16 %v478, %v476
    %v589 = vpack.c.b16 %v479, %v477
    %v590 = vpack.c.b16 %v482, %v480
    %v591 = vpack.c.b16 %v483, %v481
    %v592 = vpack.c.b16 %v486, %v484
    %v593 = vpack.c.b16 %v487, %v485
    %v594 = vpack.c.b16 %v490, %v488
    %v595 = vpack.c.b16 %v491, %v489
    %v596 = vpack.c.b16 %v494, %v492
    %v597 = vpack.c.b16 %v495, %v493
    %v598 = vpack.c.b16 %v498, %v496
    %v599 = vpack.c.b16 %v499, %v497
    %v600 = vpack.c.b16 %v502, %v500
    %v601 = vpack.c.b16 %v503, %v501
    %vm700 = vcmask 130048
    %v702 = vsel %vm700, %v111, 0
    %704 = vmatpush.bf16.msra.mxu0 %v518
    %705 = vmatpush.bf16.msra.mxu0 %v516
    %706 = vmatpush.bf16.msra.mxu0 %v514
    %707 = vmatpush.bf16.msra.mxu0 %v512
    %708 = vmatpush.bf16.msra.mxu0 %v510
    %709 = vmatpush.bf16.msra.mxu0 %v508
    %710 = vmatpush.bf16.msra.mxu0 %v506
    %711 = vmatpush.bf16.msra.mxu0 %v504
    %712 = vmatmul.bf16.gmra.mxu0 %v105
    %v713 = vpop.f32.mrf.mxu0
    %v714 = vadd.f32 0.0, %v713
    %v715 = vpop.f32.mrf.mxu0
    %716 = vdwg.mxu0
    %717 = vmatpush.bf16.msra.mxu0 %v534
    %718 = vmatpush.bf16.msra.mxu0 %v532
    %719 = vmatpush.bf16.msra.mxu0 %v530
    %720 = vmatpush.bf16.msra.mxu0 %v528
    %721 = vmatpush.bf16.msra.mxu0 %v526
    %722 = vmatpush.bf16.msra.mxu0 %v524
    %723 = vmatpush.bf16.msra.mxu0 %v522
    %724 = vmatpush.bf16.msra.mxu0 %v520
    %725 = vmatmul.bf16.gmra.mxu0 %v106
    %v726 = vpop.f32.mrf.mxu0
    %v727 = vadd.f32 %v714, %v726
    %v728 = vpop.f32.mrf.mxu0
    %729 = vdwg.mxu0
    %730 = vmatpush.bf16.msra.mxu0 %v550
    %731 = vmatpush.bf16.msra.mxu0 %v548
    %732 = vmatpush.bf16.msra.mxu0 %v546
    %733 = vmatpush.bf16.msra.mxu0 %v544
    %734 = vmatpush.bf16.msra.mxu0 %v542
    %735 = vmatpush.bf16.msra.mxu0 %v540
    %736 = vmatpush.bf16.msra.mxu0 %v538
    %737 = vmatpush.bf16.msra.mxu0 %v536
    %738 = vmatmul.bf16.gmra.mxu0 %v107
    %v739 = vpop.f32.mrf.mxu0
    %v740 = vadd.f32 %v727, %v739
    %v741 = vpop.f32.mrf.mxu0
    %742 = vdwg.mxu0
    %743 = vmatpush.bf16.msra.mxu0 %v566
    %744 = vmatpush.bf16.msra.mxu0 %v564
    %745 = vmatpush.bf16.msra.mxu0 %v562
    %746 = vmatpush.bf16.msra.mxu0 %v560
    %747 = vmatpush.bf16.msra.mxu0 %v558
    %748 = vmatpush.bf16.msra.mxu0 %v556
    %749 = vmatpush.bf16.msra.mxu0 %v554
    %750 = vmatpush.bf16.msra.mxu0 %v552
    %751 = vmatmul.bf16.gmra.mxu0 %v108
    %v752 = vpop.f32.mrf.mxu0
    %v753 = vadd.f32 %v740, %v752
    %v754 = vpop.f32.mrf.mxu0
    %755 = vdwg.mxu0
    %756 = vmatpush.bf16.msra.mxu0 %v582
    %757 = vmatpush.bf16.msra.mxu0 %v580
    %758 = vmatpush.bf16.msra.mxu0 %v578
    %759 = vmatpush.bf16.msra.mxu0 %v576
    %760 = vmatpush.bf16.msra.mxu0 %v574
    %761 = vmatpush.bf16.msra.mxu0 %v572
    %762 = vmatpush.bf16.msra.mxu0 %v570
    %763 = vmatpush.bf16.msra.mxu0 %v568
    %764 = vmatmul.bf16.gmra.mxu0 %v109
    %v765 = vpop.f32.mrf.mxu0
    %v766 = vadd.f32 %v753, %v765
    %v767 = vpop.f32.mrf.mxu0
    %768 = vdwg.mxu0
    %769 = vmatpush.bf16.msra.mxu0 %v598
    %770 = vmatpush.bf16.msra.mxu0 %v596
    %771 = vmatpush.bf16.msra.mxu0 %v594
    %772 = vmatpush.bf16.msra.mxu0 %v592
    %773 = vmatpush.bf16.msra.mxu0 %v590
    %774 = vmatpush.bf16.msra.mxu0 %v588
    %775 = vmatpush.bf16.msra.mxu0 %v586
    %776 = vmatpush.bf16.msra.mxu0 %v584
    %777 = vmatmul.bf16.gmra.mxu0 %v110
    %v778 = vpop.f32.mrf.mxu0
    %v779 = vadd.f32 %v766, %v778
    %v780 = vpop.f32.mrf.mxu0
    %781 = vdwg.mxu0
    %782 = vmatpush.bf16.msra.mxu0 0
    %783 = vmatpush.bf16.msra.mxu0 0
    %784 = vmatpush.bf16.msra.mxu0 0
    %785 = vmatpush.bf16.msra.mxu0 0
    %786 = vmatpush.bf16.msra.mxu0 0
    %787 = vmatpush.bf16.msra.mxu0 0
    %788 = vmatpush.bf16.msra.mxu0 0
    %789 = vmatpush.bf16.msra.mxu0 %v600
    %790 = vmatmul.bf16.gmra.mxu0 %v702
    %v791 = vpop.f32.mrf.mxu0
    %v792 = vadd.f32 %v779, %v791
    %v793 = vpop.f32.mrf.mxu0
    %794 = vdwg.mxu0
    %795 = vmatpush.bf16.msra.mxu0 %v519
    %796 = vmatpush.bf16.msra.mxu0 %v517
    %797 = vmatpush.bf16.msra.mxu0 %v515
    %798 = vmatpush.bf16.msra.mxu0 %v513
    %799 = vmatpush.bf16.msra.mxu0 %v511
    %800 = vmatpush.bf16.msra.mxu0 %v509
    %801 = vmatpush.bf16.msra.mxu0 %v507
    %802 = vmatpush.bf16.msra.mxu0 %v505
    %803 = vmatmul.bf16.gmra.mxu0 %v105
    %v804 = vpop.f32.mrf.mxu0
    %v805 = vadd.f32 0.0, %v804
    %v806 = vpop.f32.mrf.mxu0
    %807 = vdwg.mxu0
    %808 = vmatpush.bf16.msra.mxu0 %v535
    %809 = vmatpush.bf16.msra.mxu0 %v533
    %810 = vmatpush.bf16.msra.mxu0 %v531
    %811 = vmatpush.bf16.msra.mxu0 %v529
    %812 = vmatpush.bf16.msra.mxu0 %v527
    %813 = vmatpush.bf16.msra.mxu0 %v525
    %814 = vmatpush.bf16.msra.mxu0 %v523
    %815 = vmatpush.bf16.msra.mxu0 %v521
    %816 = vmatmul.bf16.gmra.mxu0 %v106
    %v817 = vpop.f32.mrf.mxu0
    %v818 = vadd.f32 %v805, %v817
    %v819 = vpop.f32.mrf.mxu0
    %820 = vdwg.mxu0
    %821 = vmatpush.bf16.msra.mxu0 %v551
    %822 = vmatpush.bf16.msra.mxu0 %v549
    %823 = vmatpush.bf16.msra.mxu0 %v547
    %824 = vmatpush.bf16.msra.mxu0 %v545
    %825 = vmatpush.bf16.msra.mxu0 %v543
    %826 = vmatpush.bf16.msra.mxu0 %v541
    %827 = vmatpush.bf16.msra.mxu0 %v539
    %828 = vmatpush.bf16.msra.mxu0 %v537
    %829 = vmatmul.bf16.gmra.mxu0 %v107
    %v830 = vpop.f32.mrf.mxu0
    %v831 = vadd.f32 %v818, %v830
    %v832 = vpop.f32.mrf.mxu0
    %833 = vdwg.mxu0
    %834 = vmatpush.bf16.msra.mxu0 %v567
    %835 = vmatpush.bf16.msra.mxu0 %v565
    %836 = vmatpush.bf16.msra.mxu0 %v563
    %837 = vmatpush.bf16.msra.mxu0 %v561
    %838 = vmatpush.bf16.msra.mxu0 %v559
    %839 = vmatpush.bf16.msra.mxu0 %v557
    %840 = vmatpush.bf16.msra.mxu0 %v555
    %841 = vmatpush.bf16.msra.mxu0 %v553
    %842 = vmatmul.bf16.gmra.mxu0 %v108
    %v843 = vpop.f32.mrf.mxu0
    %v844 = vadd.f32 %v831, %v843
    %v845 = vpop.f32.mrf.mxu0
    %846 = vdwg.mxu0
    %847 = vmatpush.bf16.msra.mxu0 %v583
    %848 = vmatpush.bf16.msra.mxu0 %v581
    %849 = vmatpush.bf16.msra.mxu0 %v579
    %850 = vmatpush.bf16.msra.mxu0 %v577
    %851 = vmatpush.bf16.msra.mxu0 %v575
    %852 = vmatpush.bf16.msra.mxu0 %v573
    %853 = vmatpush.bf16.msra.mxu0 %v571
    %854 = vmatpush.bf16.msra.mxu0 %v569
    %855 = vmatmul.bf16.gmra.mxu0 %v109
    %v856 = vpop.f32.mrf.mxu0
    %v857 = vadd.f32 %v844, %v856
    %v858 = vpop.f32.mrf.mxu0
    %859 = vdwg.mxu0
    %860 = vmatpush.bf16.msra.mxu0 %v599
    %861 = vmatpush.bf16.msra.mxu0 %v597
    %862 = vmatpush.bf16.msra.mxu0 %v595
    %863 = vmatpush.bf16.msra.mxu0 %v593
    %864 = vmatpush.bf16.msra.mxu0 %v591
    %865 = vmatpush.bf16.msra.mxu0 %v589
    %866 = vmatpush.bf16.msra.mxu0 %v587
    %867 = vmatpush.bf16.msra.mxu0 %v585
    %868 = vmatmul.bf16.gmra.mxu0 %v110
    %v869 = vpop.f32.mrf.mxu0
    %v870 = vadd.f32 %v857, %v869
    %v871 = vpop.f32.mrf.mxu0
    %872 = vdwg.mxu0
    %873 = vmatpush.bf16.msra.mxu0 0
    %874 = vmatpush.bf16.msra.mxu0 0
    %875 = vmatpush.bf16.msra.mxu0 0
    %876 = vmatpush.bf16.msra.mxu0 0
    %877 = vmatpush.bf16.msra.mxu0 0
    %878 = vmatpush.bf16.msra.mxu0 0
    %879 = vmatpush.bf16.msra.mxu0 0
    %880 = vmatpush.bf16.msra.mxu0 %v601
    %881 = vmatmul.bf16.gmra.mxu0 %v702
    %v882 = vpop.f32.mrf.mxu0
    %v883 = vadd.f32 %v870, %v882
    %v884 = vpop.f32.mrf.mxu0
    %885 = vdwg.mxu0
    %v886 = vmax.f32 %v792, 0.0
    %v887 = vmax.f32 %v883, 0.0
    %v888 = vpack.c.bf16 %v886, %v886
    %v889 = vpack.c.bf16 %v887, %v887
    %v890 = vld [vmem:[#allocation7] sm:$0xf]
    %v891 = vld [vmem:[#allocation7 + $0x4] sm:$0xf]
    %v892 = vld [vmem:[#allocation7 + $0x8] sm:$0xf]
    %v893 = vld [vmem:[#allocation7 + $0xc] sm:$0xf]
    %v894 = vld [vmem:[#allocation7 + $0x10] sm:$0xf]
    %v895 = vld [vmem:[#allocation7 + $0x14] sm:$0xf]
    %v896 = vld [vmem:[#allocation7 + $0x18] sm:$0xf]
    %v897 = vld [vmem:[#allocation7 + $0x1c] sm:$0xf]
    %v898 = vld [vmem:[#allocation7 + $0x20] sm:$0xf]
    %v899 = vld [vmem:[#allocation7 + $0x24] sm:$0xf]
    %v900 = vld [vmem:[#allocation7 + $0x28] sm:$0xf]
    %v901 = vld [vmem:[#allocation7 + $0x2c] sm:$0xf]
    %v902 = vld [vmem:[#allocation7 + $0x30] sm:$0xf]
    %v903 = vld [vmem:[#allocation7 + $0x34] sm:$0xf]
    %v904 = vld [vmem:[#allocation7 + $0x38] sm:$0xf]
    %v905 = vld [vmem:[#allocation7 + $0x3c] sm:$0xf]
    %v906 = vld [vmem:[#allocation7 + $0x40] sm:$0xf]
    %v907 = vld [vmem:[#allocation7 + $0x44] sm:$0xf]
    %v908 = vld [vmem:[#allocation7 + $0x48] sm:$0xf]
    %v909 = vld [vmem:[#allocation7 + $0x4c] sm:$0xf]
    %v910 = vld [vmem:[#allocation7 + $0x50] sm:$0xf]
    %v911 = vld [vmem:[#allocation7 + $0x54] sm:$0xf]
    %v912 = vld [vmem:[#allocation7 + $0x58] sm:$0xf]
    %v913 = vld [vmem:[#allocation7 + $0x5c] sm:$0xf]
    %v914 = vld [vmem:[#allocation7 + $0x60] sm:$0xf]
    %v915 = vld [vmem:[#allocation7 + $0x64] sm:$0xf]
    %v916 = vld [vmem:[#allocation7 + $0x68] sm:$0xf]
    %v917 = vld [vmem:[#allocation7 + $0x6c] sm:$0xf]
    %v918 = vld [vmem:[#allocation7 + $0x70] sm:$0xf]
    %v919 = vld [vmem:[#allocation7 + $0x74] sm:$0xf]
    %v920 = vld [vmem:[#allocation7 + $0x78] sm:$0xf]
    %v921 = vld [vmem:[#allocation7 + $0x7c] sm:$0xf]
    %v954 = vunpack.c.l.b16 %v890
    %v955 = vunpack.c.l.b16 %v891
    %v956 = vunpack.c.l.b16 %v892
    %v957 = vunpack.c.l.b16 %v893
    %v958 = vunpack.c.l.b16 %v894
    %v959 = vunpack.c.l.b16 %v895
    %v960 = vunpack.c.l.b16 %v896
    %v961 = vunpack.c.l.b16 %v897
    %v962 = vunpack.c.l.b16 %v898
    %v963 = vunpack.c.l.b16 %v899
    %v964 = vunpack.c.l.b16 %v900
    %v965 = vunpack.c.l.b16 %v901
    %v966 = vunpack.c.l.b16 %v902
    %v967 = vunpack.c.l.b16 %v903
    %v968 = vunpack.c.l.b16 %v904
    %v969 = vunpack.c.l.b16 %v905
    %v970 = vunpack.c.l.b16 %v906
    %v971 = vunpack.c.l.b16 %v907
    %v972 = vunpack.c.l.b16 %v908
    %v973 = vunpack.c.l.b16 %v909
    %v974 = vunpack.c.l.b16 %v910
    %v975 = vunpack.c.l.b16 %v911
    %v976 = vunpack.c.l.b16 %v912
    %v977 = vunpack.c.l.b16 %v913
    %v978 = vunpack.c.l.b16 %v914
    %v979 = vunpack.c.l.b16 %v915
    %v980 = vunpack.c.l.b16 %v916
    %v981 = vunpack.c.l.b16 %v917
    %v982 = vunpack.c.l.b16 %v918
    %v983 = vunpack.c.l.b16 %v919
    %v984 = vunpack.c.l.b16 %v920
    %v985 = vunpack.c.l.b16 %v921
    %v986 = vpack.c.b16 %v955, %v954
    %v987 = vpack.c.b16 %v957, %v956
    %v988 = vpack.c.b16 %v959, %v958
    %v989 = vpack.c.b16 %v961, %v960
    %v990 = vpack.c.b16 %v963, %v962
    %v991 = vpack.c.b16 %v965, %v964
    %v992 = vpack.c.b16 %v967, %v966
    %v993 = vpack.c.b16 %v969, %v968
    %v994 = vpack.c.b16 %v971, %v970
    %v995 = vpack.c.b16 %v973, %v972
    %v996 = vpack.c.b16 %v975, %v974
    %v997 = vpack.c.b16 %v977, %v976
    %v998 = vpack.c.b16 %v979, %v978
    %v999 = vpack.c.b16 %v981, %v980
    %v1000 = vpack.c.b16 %v983, %v982
    %v1001 = vpack.c.b16 %v985, %v984
    %1018 = vmatpush.bf16.msra.mxu0 %v993
    %1019 = vmatpush.bf16.msra.mxu0 %v992
    %1020 = vmatpush.bf16.msra.mxu0 %v991
    %1021 = vmatpush.bf16.msra.mxu0 %v990
    %1022 = vmatpush.bf16.msra.mxu0 %v989
    %1023 = vmatpush.bf16.msra.mxu0 %v988
    %1024 = vmatpush.bf16.msra.mxu0 %v987
    %1025 = vmatpush.bf16.msra.mxu0 %v986
    %1026 = vmatmul.bf16.gmra.mxu0 %v888
    %v1027 = vpop.f32.mrf.mxu0
    %v1028 = vadd.f32 0.0, %v1027
    %v1029 = vpop.f32.mrf.mxu0
    %1030 = vdwg.mxu0
    %1031 = vmatpush.bf16.msra.mxu0 %v1001
    %1032 = vmatpush.bf16.msra.mxu0 %v1000
    %1033 = vmatpush.bf16.msra.mxu0 %v999
    %1034 = vmatpush.bf16.msra.mxu0 %v998
    %1035 = vmatpush.bf16.msra.mxu0 %v997
    %1036 = vmatpush.bf16.msra.mxu0 %v996
    %1037 = vmatpush.bf16.msra.mxu0 %v995
    %1038 = vmatpush.bf16.msra.mxu0 %v994
    %1039 = vmatmul.bf16.gmra.mxu0 %v889
    %v1040 = vpop.f32.mrf.mxu0
    %v1041 = vadd.f32 %v1028, %v1040
    %v1042 = vpop.f32.mrf.mxu0
    %1043 = vdwg.mxu0
    %v1044 = vmax.f32 %v1041, 0.0
    %v1045 = vpack.c.bf16 %v1044, %v1044
    %v1046 = vld [vmem:[#allocation8] sm:$0xf]
    %v1047 = vld [vmem:[#allocation8 + $0x4] sm:$0xf]
    %v1048 = vld [vmem:[#allocation8 + $0x8] sm:$0xf]
    %v1049 = vld [vmem:[#allocation8 + $0xc] sm:$0xf]
    %v1050 = vld [vmem:[#allocation8 + $0x10] sm:$0xf]
    %v1051 = vld [vmem:[#allocation8 + $0x14] sm:$0xf]
    %v1052 = vld [vmem:[#allocation8 + $0x18] sm:$0xf]
    %v1053 = vld [vmem:[#allocation8 + $0x1c] sm:$0xf]
    %v1054 = vld [vmem:[#allocation8 + $0x20] sm:$0xf]
    %v1055 = vld [vmem:[#allocation8 + $0x24] sm:$0xf]
    %v1056 = vld [vmem:[#allocation8 + $0x28] sm:$0xf]
    %v1057 = vld [vmem:[#allocation8 + $0x2c] sm:$0xf]
    %v1058 = vld [vmem:[#allocation8 + $0x30] sm:$0xf]
    %v1059 = vld [vmem:[#allocation8 + $0x34] sm:$0xf]
    %v1060 = vld [vmem:[#allocation8 + $0x38] sm:$0xf]
    %v1061 = vld [vmem:[#allocation8 + $0x3c] sm:$0xf]
    %v1078 = vunpack.c.l.b16 %v1046
    %v1079 = vunpack.c.l.b16 %v1047
    %v1080 = vunpack.c.l.b16 %v1048
    %v1081 = vunpack.c.l.b16 %v1049
    %v1082 = vunpack.c.l.b16 %v1050
    %v1083 = vunpack.c.l.b16 %v1051
    %v1084 = vunpack.c.l.b16 %v1052
    %v1085 = vunpack.c.l.b16 %v1053
    %v1086 = vunpack.c.l.b16 %v1054
    %v1087 = vunpack.c.l.b16 %v1055
    %v1088 = vunpack.c.l.b16 %v1056
    %v1089 = vunpack.c.l.b16 %v1057
    %v1090 = vunpack.c.l.b16 %v1058
    %v1091 = vunpack.c.l.b16 %v1059
    %v1092 = vunpack.c.l.b16 %v1060
    %v1093 = vunpack.c.l.b16 %v1061
    %v1094 = vpack.c.b16 %v1079, %v1078
    %v1095 = vpack.c.b16 %v1081, %v1080
    %v1096 = vpack.c.b16 %v1083, %v1082
    %v1097 = vpack.c.b16 %v1085, %v1084
    %v1098 = vpack.c.b16 %v1087, %v1086
    %v1099 = vpack.c.b16 %v1089, %v1088
    %v1100 = vpack.c.b16 %v1091, %v1090
    %v1101 = vpack.c.b16 %v1093, %v1092
    %1110 = vmatpush.bf16.msra.mxu0 %v1101
    %1111 = vmatpush.bf16.msra.mxu0 %v1100
    %1112 = vmatpush.bf16.msra.mxu0 %v1099
    %1113 = vmatpush.bf16.msra.mxu0 %v1098
    %1114 = vmatpush.bf16.msra.mxu0 %v1097
    %1115 = vmatpush.bf16.msra.mxu0 %v1096
    %1116 = vmatpush.bf16.msra.mxu0 %v1095
    %1117 = vmatpush.bf16.msra.mxu0 %v1094
    %1118 = vmatmul.bf16.gmra.mxu0 %v1045
    %v1119 = vpop.f32.mrf.mxu0
    %v1120 = vadd.f32 0.0, %v1119
    %v1121 = vpop.f32.mrf.mxu0
    %1122 = vdwg.mxu0
    %v1123 = vmax.f32 %v1120, 0.0
    %v1124 = vpack.c.bf16 %v1123, %v1123
    %v1125 = vld [vmem:[#allocation10] sm:$0xf]
    %v1126 = vld [vmem:[#allocation10 + $0x4] sm:$0xf]
    %v1127 = vld [vmem:[#allocation10 + $0x8] sm:$0xf]
    %v1128 = vld [vmem:[#allocation10 + $0xc] sm:$0xf]
    %v1129 = vld [vmem:[#allocation10 + $0x10] sm:$0xf]
    %v1130 = vld [vmem:[#allocation10 + $0x14] sm:$0xf]
    %v1131 = vld [vmem:[#allocation10 + $0x18] sm:$0xf]
    %v1132 = vld [vmem:[#allocation10 + $0x1c] sm:$0xf]
    %v1133 = vld [vmem:[#allocation10 + $0x20] sm:$0xf]
    %v1134 = vld [vmem:[#allocation10 + $0x24] sm:$0xf]
    %v1135 = vld [vmem:[#allocation10 + $0x28] sm:$0xf]
    %v1136 = vld [vmem:[#allocation10 + $0x2c] sm:$0xf]
    %v1137 = vld [vmem:[#allocation10 + $0x30] sm:$0xf]
    %v1138 = vld [vmem:[#allocation10 + $0x34] sm:$0xf]
    %v1139 = vld [vmem:[#allocation10 + $0x38] sm:$0xf]
    %v1140 = vld [vmem:[#allocation10 + $0x3c] sm:$0xf]
    %v1157 = vunpack.c.l.b16 %v1125
    %v1158 = vunpack.c.l.b16 %v1126
    %v1159 = vunpack.c.l.b16 %v1127
    %v1160 = vunpack.c.l.b16 %v1128
    %v1161 = vunpack.c.l.b16 %v1129
    %v1162 = vunpack.c.l.b16 %v1130
    %v1163 = vunpack.c.l.b16 %v1131
    %v1164 = vunpack.c.l.b16 %v1132
    %v1165 = vunpack.c.l.b16 %v1133
    %v1166 = vunpack.c.l.b16 %v1134
    %v1167 = vunpack.c.l.b16 %v1135
    %v1168 = vunpack.c.l.b16 %v1136
    %v1169 = vunpack.c.l.b16 %v1137
    %v1170 = vunpack.c.l.b16 %v1138
    %v1171 = vunpack.c.l.b16 %v1139
    %v1172 = vunpack.c.l.b16 %v1140
    %v1173 = vpack.c.b16 %v1158, %v1157
    %v1174 = vpack.c.b16 %v1160, %v1159
    %v1175 = vpack.c.b16 %v1162, %v1161
    %v1176 = vpack.c.b16 %v1164, %v1163
    %v1177 = vpack.c.b16 %v1166, %v1165
    %v1178 = vpack.c.b16 %v1168, %v1167
    %v1179 = vpack.c.b16 %v1170, %v1169
    %v1180 = vpack.c.b16 %v1172, %v1171
    %1189 = vmatpush.bf16.msra.mxu0 %v1180
    %1190 = vmatpush.bf16.msra.mxu0 %v1179
    %1191 = vmatpush.bf16.msra.mxu0 %v1178
    %1192 = vmatpush.bf16.msra.mxu0 %v1177
    %1193 = vmatpush.bf16.msra.mxu0 %v1176
    %1194 = vmatpush.bf16.msra.mxu0 %v1175
    %1195 = vmatpush.bf16.msra.mxu0 %v1174
    %1196 = vmatpush.bf16.msra.mxu0 %v1173
    %1197 = vmatmul.bf16.gmra.mxu0 %v1124
    %v1198 = vpop.f32.mrf.mxu0
    %v1199 = vadd.f32 0.0, %v1198
    %v1200 = vpop.f32.mrf.mxu0
    %1201 = vdwg.mxu0
    %v1202 = vpack.c.bf16 %v1199, %v1199
    %1203 = vst [vmem:[#allocation11] sm:$0xf] %v1202
    // Predicated region
    $region42: #{tpu_custom_call.1} parent=1 // pred_check
      _
    $region43: #{tpu_custom_call.1} parent=1 // pred_check_branch
      %1205 = sbr.rel (0) target = $region45
    $region44: #{tpu_custom_call.1} parent=1 // pred_region
      %1207 = vsyncadd [#allocation4], 0
      %s1209 = sshll.u32 [#allocation11], 4
      %s1210 = int_to_ptr.vmem [resolvable:$true] %s1209
      %s1211 = sshll.u32 %s5, 4
      %s1212 = int_to_ptr.hbm [resolvable:$true] %s1211
      %1214 = dma.vmem_to_hbm [thread:$0]  %s1210, 64, %s1212, [#allocation4]
    $region45: #{tpu_custom_call.1} parent=1 // pred_fallthru
      _
    // Predicated region
    $region46: #{tpu_custom_call.1} parent=1 // pred_check
      _
    $region47: #{tpu_custom_call.1} parent=1 // pred_check_branch
      %1216 = sbr.rel (0) target = $region49
    $region48: #{tpu_custom_call.1} parent=1 // pred_region
      %1218 = dma.done [#allocation4], 64
    $region49: #{tpu_custom_call.1} parent=1 // pred_fallthru
      _
    %1219 = vsyncpa [#allocation3], 1
    %1220 = vsyncpa [#allocation6], 1
    %1221 = vsyncpa [#allocation9], 1
    %1222 = vsyncpa [#allocation4], 1

</llo_original>
